<compile_context>
chip_gen: v6e
topology: v6e:2x2x1
jax: 0.10.0
libtpu: 0.0.40
codegen_flags: <defaults>
</compile_context>

<pallas_src>
import jax
import jax.numpy as jnp
from jax.experimental import pallas as pl
from jax.experimental.pallas import tpu as pltpu


def _masked_softmax_kernel(sx_ref, sy_ref, mask_ref, out_ref):
    # sx_ref: (Bt, Lxt, 1)  sy_ref: (Bt, 1, Ly)  mask_ref: (Bt, 1, Ly) f32 (1.0 = masked)
    scores = sx_ref[...] + sy_ref[...]                      # (Bt, Lxt, Ly) broadcast add
    maskf = mask_ref[...]                                   # broadcasts over Lx
    # Exact equivalent of masked_fill_(mask, -1e7) via pure f32 arithmetic select.
    scores = scores * (1.0 - maskf) + maskf * jnp.float32(-1.0e7)
    m = jnp.max(scores, axis=-1, keepdims=True)
    e = jnp.exp(scores - m)
    out_ref[...] = (e / jnp.sum(e, axis=-1, keepdims=True)).astype(out_ref.dtype)


def _softmax_kernel(sx_ref, sy_ref, out_ref):
    scores = sx_ref[...] + sy_ref[...]                      # (Bt, Lxt, Ly)
    m = jnp.max(scores, axis=-1, keepdims=True)
    e = jnp.exp(scores - m)
    out_ref[...] = (e / jnp.sum(e, axis=-1, keepdims=True)).astype(out_ref.dtype)


def _choose_tiles(B, Lx, Ly):
    """Pick (block_b, block_lx).

    Largest batch tile (divisor of B) whose double-buffered VMEM blocks fit a
    conservative 8 MiB budget (safe on v7x's 64 MiB physical / 32 MiB scoped),
    keeping the grid length >= 2 so both v7x TensorCores get work.  If even one
    batch row overflows the budget, tile Lx in multiples of 8 instead.
    """
    budget = 8 * 1024 * 1024

    def tile_bytes(bb, bl):
        # out + sx + sy + mask, f32, double-buffered
        return 2 * 4 * bb * (bl * Ly + bl + 2 * Ly)

    block_b = 1
    for d in range(1, B + 1):
        if B % d == 0 and tile_bytes(d, Lx) <= budget:
            block_b = d
    if B >= 2 and B // block_b < 2:
        for d in range(block_b - 1, 0, -1):
            if B % d == 0 and B // d >= 2:
                block_b = d
                break

    block_lx = Lx
    if tile_bytes(1, Lx) > budget:
        block_b = 1
        if Lx % 8 == 0:
            block_lx = 8
            for d in range(8, Lx + 1, 8):
                if Lx % d == 0 and tile_bytes(1, d) <= budget:
                    block_lx = d
        # else: leave block_lx = Lx (full dim always satisfies the (8,128) rule)
    return block_b, block_lx


def seq_attn_weights(x, y, y_mask, w1, b1, w2, b2, w_o, b_o,
                     *, block_b=None, block_lx=None):
    """x: (B, Lx, Dx), y: (B, Ly, Dy), y_mask: (B, Ly) bool (True = masked) or None.
    w1: (D, Dx), b1: (D,), w2: (D, Dy), b2: (D,), w_o: (1, D), b_o: (1,).
    Returns alpha: (B, Lx, Ly) float32."""
    B, Lx, Dx = x.shape
    _, Ly, Dy = y.shape
    D = w1.shape[0]

    # ---- Hoisted dense projections: full-height MXU matmuls done by XLA ------
    x_proj = jax.nn.relu(
        jnp.dot(x.reshape(-1, Dx), w1.T, preferred_element_type=jnp.float32) + b1)
    y_proj = jax.nn.relu(
        jnp.dot(y.reshape(-1, Dy), w2.T, preferred_element_type=jnp.float32) + b2)
    # o_liner(xp + yp) = v.xp + v.yp + c  (exact decomposition of Linear(D, 1))
    v = w_o.reshape(D, 1)
    sx = (jnp.dot(x_proj, v, preferred_element_type=jnp.float32)
          + b_o[0]).reshape(B, Lx, 1)                                 # (B, Lx, 1)
    sy = jnp.dot(y_proj, v,
                 preferred_element_type=jnp.float32).reshape(B, 1, Ly)  # (B, 1, Ly)

    auto_b, auto_lx = _choose_tiles(B, Lx, Ly)
    if block_b is None:
        block_b = auto_b
    if block_lx is None:
        block_lx = auto_lx
    assert B % block_b == 0, "block_b must divide B"
    assert Lx % block_lx == 0, "block_lx must divide Lx"
    grid = (B // block_b, Lx // block_lx)

    in_specs = [
        pl.BlockSpec((block_b, block_lx, 1), lambda i, j: (i, j, 0)),   # sx
        pl.BlockSpec((block_b, 1, Ly), lambda i, j: (i, 0, 0)),         # sy
    ]
    args = [sx, sy]
    if y_mask is not None:
        mask3 = y_mask.astype(jnp.float32).reshape(B, 1, Ly)
        in_specs.append(pl.BlockSpec((block_b, 1, Ly), lambda i, j: (i, 0, 0)))
        args.append(mask3)
        kernel = _masked_softmax_kernel
    else:
        kernel = _softmax_kernel                                        # no fabricated mask DMA

    out = pl.pallas_call(
        kernel,
        out_shape=jax.ShapeDtypeStruct((B, Lx, Ly), jnp.float32),
        grid=grid,
        in_specs=in_specs,
        out_specs=pl.BlockSpec((block_b, block_lx, Ly), lambda i, j: (i, j, 0)),
        compiler_params=pltpu.CompilerParams(
            dimension_semantics=("parallel", "parallel"),
            vmem_limit_bytes=32 * 1024 * 1024),
    )(*args)
    return out


if __name__ == "__main__":
    # Small shapes consistent with the module: batch=2, len_x=8, len_y=16,
    # x_input_size=32, y_input_size=16, mapped_dim=32.
    B, Lx, Ly = 2, 8, 16
    Dx, Dy, D = 32, 16, 32

    key = jax.random.PRNGKey(0)
    kx, ky, k1, k2, k3, k4, k5, k6 = jax.random.split(key, 8)

    x = jax.random.normal(kx, (B, Lx, Dx), dtype=jnp.float32)
    y = jax.random.normal(ky, (B, Ly, Dy), dtype=jnp.float32)

    # nn.Linear parameter shapes: weight (out, in), bias (out,)
    w1 = jax.random.normal(k1, (D, Dx), dtype=jnp.float32) * 0.1
    b1 = jax.random.normal(k2, (D,), dtype=jnp.float32) * 0.1
    w2 = jax.random.normal(k3, (D, Dy), dtype=jnp.float32) * 0.1
    b2 = jax.random.normal(k4, (D,), dtype=jnp.float32) * 0.1
    w_o = jax.random.normal(k5, (1, D), dtype=jnp.float32) * 0.1
    b_o = jax.random.normal(k6, (1,), dtype=jnp.float32) * 0.1

    # y_mask: True = masked (tail of every row plus two extra positions in row 0).
    y_mask = jnp.zeros((B, Ly), dtype=bool).at[:, -4:].set(True).at[0, 2:4].set(True)

    fn = jax.jit(seq_attn_weights, static_argnames=("block_b", "block_lx"))

    out = jax.block_until_ready(fn(x, y, y_mask, w1, b1, w2, b2, w_o, b_o))

    # ---- Literal-formula pure-JAX reference (matches the PyTorch module) -----
    x_proj_ref = jax.nn.relu(x.reshape(-1, Dx) @ w1.T + b1).reshape(B, Lx, D)
    y_proj_ref = jax.nn.relu(y.reshape(-1, Dy) @ w2.T + b2).reshape(B, Ly, D)
    raw = (x_proj_ref[:, :, None, :] + y_proj_ref[:, None, :, :]) @ w_o[0] + b_o[0]
    raw_masked = jnp.where(y_mask[:, None, :], jnp.float32(-1.0e7), raw)
    ref = jax.nn.softmax(raw_masked, axis=-1)

    assert out.shape == (B, Lx, Ly)
    assert jnp.allclose(out, ref, atol=1e-5, rtol=1e-5), "masked softmax mismatch"

    # ---- No-mask variant (separate kernel; no fabricated mask input) ---------
    out_nm = jax.block_until_ready(fn(x, y, None, w1, b1, w2, b2, w_o, b_o))
    ref_nm = jax.nn.softmax(raw, axis=-1)
    assert jnp.allclose(out_nm, ref_nm, atol=1e-5, rtol=1e-5), "no-mask softmax mismatch"

    print("KERNEL_OK")
</pallas_src>

<mosaic_0001>
module attributes {stable_mosaic.version = 11 : i64} {
  func.func @_masked_softmax_kernel(%arg0: i32, %arg1: i32, %arg2: memref<1x8x1xf32, #tpu.memory_space<vmem>>, %arg3: memref<1x1x16xf32, #tpu.memory_space<vmem>>, %arg4: memref<1x1x16xf32, #tpu.memory_space<vmem>>, %arg5: memref<1x8x16xf32, #tpu.memory_space<vmem>>) attributes {dimension_semantics = [#tpu.dimension_semantics<parallel>, #tpu.dimension_semantics<parallel>], iteration_bounds = array<i64: 2, 1>, scalar_prefetch = 0 : i64, scratch_operands = 0 : i64, tpu.core_type = #tpu.core_type<tc>, window_params = [{transform_indices = @transform_0, window_bounds = array<i64: 1, 8, 1>}, {transform_indices = @transform_1, window_bounds = array<i64: 1, 1, 16>}, {transform_indices = @transform_2, window_bounds = array<i64: 1, 1, 16>}, {transform_indices = @transform_3, window_bounds = array<i64: 1, 8, 16>}]} {
    %c0 = arith.constant 0 : index
    %c0_0 = arith.constant 0 : index
    %c0_1 = arith.constant 0 : index
    %0 = vector.load %arg2[%c0, %c0_0, %c0_1] : memref<1x8x1xf32, #tpu.memory_space<vmem>>, vector<1x8x1xf32>
    %c0_2 = arith.constant 0 : index
    %c0_3 = arith.constant 0 : index
    %c0_4 = arith.constant 0 : index
    %1 = vector.load %arg3[%c0_2, %c0_3, %c0_4] : memref<1x1x16xf32, #tpu.memory_space<vmem>>, vector<1x1x16xf32>
    %2 = vector.broadcast %0 : vector<1x8x1xf32> to vector<1x8x16xf32>
    %3 = vector.broadcast %1 : vector<1x1x16xf32> to vector<1x8x16xf32>
    %4 = arith.addf %2, %3 : vector<1x8x16xf32>
    %c0_5 = arith.constant 0 : index
    %c0_6 = arith.constant 0 : index
    %c0_7 = arith.constant 0 : index
    %5 = vector.load %arg4[%c0_5, %c0_6, %c0_7] : memref<1x1x16xf32, #tpu.memory_space<vmem>>, vector<1x1x16xf32>
    %cst = arith.constant 1.000000e+00 : f32
    %6 = vector.broadcast %cst : f32 to vector<1x1x16xf32>
    %7 = arith.subf %6, %5 : vector<1x1x16xf32>
    %8 = vector.broadcast %7 : vector<1x1x16xf32> to vector<1x8x16xf32>
    %9 = arith.mulf %4, %8 : vector<1x8x16xf32>
    %cst_8 = arith.constant -1.000000e+07 : f32
    %10 = vector.broadcast %cst_8 : f32 to vector<1x1x16xf32>
    %11 = arith.mulf %5, %10 : vector<1x1x16xf32>
    %12 = vector.broadcast %11 : vector<1x1x16xf32> to vector<1x8x16xf32>
    %13 = arith.addf %9, %12 : vector<1x8x16xf32>
    %cst_9 = arith.constant dense<0xFF800000> : vector<1x8xf32>
    %14 = vector.multi_reduction <maximumf>, %13, %cst_9 [2] : vector<1x8x16xf32> to vector<1x8xf32>
    %15 = vector.shape_cast %14 : vector<1x8xf32> to vector<1x8x1xf32>
    %16 = vector.broadcast %15 : vector<1x8x1xf32> to vector<1x8x16xf32>
    %17 = arith.subf %13, %16 : vector<1x8x16xf32>
    %18 = math.exp %17 : vector<1x8x16xf32>
    %cst_10 = arith.constant dense<0.000000e+00> : vector<1x8xf32>
    %19 = vector.multi_reduction <add>, %18, %cst_10 [2] : vector<1x8x16xf32> to vector<1x8xf32>
    %20 = vector.shape_cast %19 : vector<1x8xf32> to vector<1x8x1xf32>
    %21 = vector.broadcast %20 : vector<1x8x1xf32> to vector<1x8x16xf32>
    %22 = arith.divf %18, %21 : vector<1x8x16xf32>
    %c0_11 = arith.constant 0 : index
    %c0_12 = arith.constant 0 : index
    %c0_13 = arith.constant 0 : index
    %23 = vector.load %arg5[%c0_11, %c0_12, %c0_13] : memref<1x8x16xf32, #tpu.memory_space<vmem>>, vector<1x8x16xf32>
    tpu.vector_store %arg5[%c0_11, %c0_12, %c0_13], %22 {strides = array<i32>} : memref<1x8x16xf32, #tpu.memory_space<vmem>>, vector<1x8x16xf32>,
    return
  }
  func.func @transform_0(%arg0: i32, %arg1: i32) -> (i32, i32, i32) {
    %c0_i32 = arith.constant 0 : i32
    %c0_i32_0 = arith.constant 0 : i32
    return %arg0, %arg1, %c0_i32 : i32, i32, i32
  }
  func.func @transform_1(%arg0: i32, %arg1: i32) -> (i32, i32, i32) {
    %c0_i32 = arith.constant 0 : i32
    %c0_i32_0 = arith.constant 0 : i32
    %c0_i32_1 = arith.constant 0 : i32
    return %arg0, %c0_i32, %c0_i32_0 : i32, i32, i32
  }
  func.func @transform_2(%arg0: i32, %arg1: i32) -> (i32, i32, i32) {
    %c0_i32 = arith.constant 0 : i32
    %c0_i32_0 = arith.constant 0 : i32
    %c0_i32_1 = arith.constant 0 : i32
    return %arg0, %c0_i32, %c0_i32_0 : i32, i32, i32
  }
  func.func @transform_3(%arg0: i32, %arg1: i32) -> (i32, i32, i32) {
    %c0_i32 = arith.constant 0 : i32
    %c0_i32_0 = arith.constant 0 : i32
    return %arg0, %arg1, %c0_i32 : i32, i32, i32
  }
}

</mosaic_0001>

<llo_original>
// kernel: seq_attn_weights.1
$region0: #{seq_attn_weights.1}
  #allocation0 [shape = 'u32[]', space=smem, size = 0x4, offset = 0x4, fixed_abs, tag = 'smem constant byte address 0x4 - core index']
  #allocation1 [shape = 'u32[144,128]{1,0:T(1,128)}', space=vmem, size = 0x12000, scoped, tag = 'internal scratch']
  %s0 = inlined_call_operand.vmem [shape: f32[2,8,1], index: 0, kind: input, shape index: {}]
  %s1 = inlined_call_operand.vmem [shape: f32[2,1,16], index: 1, kind: input, shape index: {}]
  %s2 = inlined_call_operand.vmem [shape: f32[2,1,16], index: 2, kind: input, shape index: {}]
  %s3 = inlined_call_operand.hbm [shape: f32[2,8,16], index: 3, kind: output, shape index: {}]
  %s4 = sld [smem:[#allocation0]]
  $region45: #{seq_attn_weights.1} parent=0
    _
  %s6 = ssub.s32 1, %s4
  %s7 = scalar_select 0, %s6, %s4
  $region1: #{seq_attn_weights.1} parent=0
    #allocation2 [shape = 'u8[8192]{0}', space=vmem, size = 0x2000, scoped, tag = 'output window, operand 0']
    #allocation3 [shape = 's32[2]{0}', space=sflag, size = 0x8, scoped, tag = 'scoped memory for seq_attn_weights.1']
    %8 = vsyncpa [#allocation3], 0
    %s9 = scalar_lea.sflag [#allocation3], 1
    %10 = vsyncpa %s9, 0
    loop: start=0, step=1, limit=4
    $region2: #{seq_attn_weights.1} parent=1 // loop_pre_header
      _
    $region3: #{seq_attn_weights.1} parent=1 // loop_header
      %s12 = sphi 0, %s16
      %p13 = scmp.ge.s32.totalorder %s12, 4
      %s19 = sphi 0, %s31
      %s20 = sphi 0, %s27
      %s21 = sphi 0, %s19
      %s22 = sphi 0, %s20
      %s23 = sphi 0, %s21
      %s24 = sphi 0, %s22
      %s36 = sphi 0, %s38
      %s39 = sphi 0, %s36
      %s40 = sphi 0, %s39
      %s56 = sphi 0, %s40
      %s62 = sphi 0, %s64
      %s65 = sphi 0, %s62
      %s66 = sphi 0, %s65
      %s82 = sphi 0, %s66
      %s88 = sphi 0, %s90
      %s91 = sphi 0, %s88
      %s92 = sphi 0, %s91
      %s108 = sphi 0, %s92
      %s116 = sphi 0, %s118
      %s119 = sphi 0, %s116
      %s120 = sphi 0, %s119
      %s136 = sphi 0, %s120
    $region4: #{seq_attn_weights.1} parent=1 // loop_header_branch
      %15 = sbr.rel (%p13) target = $region8
    $region5: #{seq_attn_weights.1} parent=1 // loop_body
      %s17 = ssub.s32 %s12, 1
      %s18 = ssub.s32 %s12, 2
      %s25 = sadd.s32 1, %s20
      %p26 = scmp.ge.s32.totalorder %s25, 1
      %s27 = scalar_select %p26, 0, %s25
      %s28 = sadd.s32 1, %s19
      %s29 = scalar_select %p26, %s28, %s19
      %p30 = scmp.ge.s32.totalorder %s29, 2
      %s31 = scalar_select %p30, 0, %s29
      %s32 = ssub.s32 %s19, %s31
      %s33 = ssub.s32 %s20, %s27
      %s34 = sor.u32 %s32, %s33
      %p35 = scmp.eq.s32.totalorder %s34, 0
      %s37 = sadd.s32 %s36, 1
      %s38 = scalar_select %p35, %s36, %s37
      %p41 = pneg %p35
      %p42 = scmp.eq.s32.totalorder %s12, 1
      %p43 = por %p41, %p42
      %p44 = scmp.ne.s32.totalorder %s36, %s39
      %p45 = scmp.eq.s32.totalorder %s12, 0
      %p46 = por %p44, %p45
      %p47 = scmp.ne.s32.totalorder %s36, %s39
      %p48 = scmp.eq.s32.totalorder %s17, 1
      %p49 = por %p47, %p48
      %p50 = scmp.ne.s32.totalorder %s39, %s40
      %p51 = scmp.eq.s32.totalorder %s17, 0
      %p52 = por %p50, %p51
      %p53 = scmp.ne.s32.totalorder %s39, %s40
      %p54 = scmp.eq.s32.totalorder %s18, 1
      %p55 = por %p53, %p54
      %p57 = scmp.ne.s32.totalorder %s40, %s56
      %p58 = scmp.eq.s32.totalorder %s18, 0
      %p59 = por %p57, %p58
      %s60 = ssub.s32 %s19, %s31
      %p61 = scmp.eq.s32.totalorder %s60, 0
      %s63 = sadd.s32 %s62, 1
      %s64 = scalar_select %p61, %s62, %s63
      %p67 = pneg %p61
      %p68 = scmp.eq.s32.totalorder %s12, 1
      %p69 = por %p67, %p68
      %p70 = scmp.ne.s32.totalorder %s62, %s65
      %p71 = scmp.eq.s32.totalorder %s12, 0
      %p72 = por %p70, %p71
      %p73 = scmp.ne.s32.totalorder %s62, %s65
      %p74 = scmp.eq.s32.totalorder %s17, 1
      %p75 = por %p73, %p74
      %p76 = scmp.ne.s32.totalorder %s65, %s66
      %p77 = scmp.eq.s32.totalorder %s17, 0
      %p78 = por %p76, %p77
      %p79 = scmp.ne.s32.totalorder %s65, %s66
      %p80 = scmp.eq.s32.totalorder %s18, 1
      %p81 = por %p79, %p80
      %p83 = scmp.ne.s32.totalorder %s66, %s82
      %p84 = scmp.eq.s32.totalorder %s18, 0
      %p85 = por %p83, %p84
      %s86 = ssub.s32 %s19, %s31
      %p87 = scmp.eq.s32.totalorder %s86, 0
      %s89 = sadd.s32 %s88, 1
      %s90 = scalar_select %p87, %s88, %s89
      %p93 = pneg %p87
      %p94 = scmp.eq.s32.totalorder %s12, 1
      %p95 = por %p93, %p94
      %p96 = scmp.ne.s32.totalorder %s88, %s91
      %p97 = scmp.eq.s32.totalorder %s12, 0
      %p98 = por %p96, %p97
      %p99 = scmp.ne.s32.totalorder %s88, %s91
      %p100 = scmp.eq.s32.totalorder %s17, 1
      %p101 = por %p99, %p100
      %p102 = scmp.ne.s32.totalorder %s91, %s92
      %p103 = scmp.eq.s32.totalorder %s17, 0
      %p104 = por %p102, %p103
      %p105 = scmp.ne.s32.totalorder %s91, %s92
      %p106 = scmp.eq.s32.totalorder %s18, 1
      %p107 = por %p105, %p106
      %p109 = scmp.ne.s32.totalorder %s92, %s108
      %p110 = scmp.eq.s32.totalorder %s18, 0
      %p111 = por %p109, %p110
      %s112 = ssub.s32 %s19, %s31
      %s113 = ssub.s32 %s20, %s27
      %s114 = sor.u32 %s112, %s113
      %p115 = scmp.eq.s32.totalorder %s114, 0
      %s117 = sadd.s32 %s116, 1
      %s118 = scalar_select %p115, %s116, %s117
      %p121 = pneg %p115
      %p122 = scmp.eq.s32.totalorder %s12, 1
      %p123 = por %p121, %p122
      %p124 = scmp.ne.s32.totalorder %s116, %s119
      %p125 = scmp.eq.s32.totalorder %s12, 0
      %p126 = por %p124, %p125
      %p127 = scmp.ne.s32.totalorder %s116, %s119
      %p128 = scmp.eq.s32.totalorder %s17, 1
      %p129 = por %p127, %p128
      %p130 = scmp.ne.s32.totalorder %s119, %s120
      %p131 = scmp.eq.s32.totalorder %s17, 0
      %p132 = por %p130, %p131
      %p133 = scmp.ne.s32.totalorder %s119, %s120
      %p134 = scmp.eq.s32.totalorder %s18, 1
      %p135 = por %p133, %p134
      %p137 = scmp.ne.s32.totalorder %s120, %s136
      %p138 = scmp.eq.s32.totalorder %s18, 0
      %p139 = por %p137, %p138
      %p140 = scmp.le.s32.totalorder 1, %s12
      %p141 = scmp.lt.s32.totalorder %s12, 3
      %p142 = pnand %p140, %p141
      %p143 = pneg %p142
      // Predicated region
      $region9: #{seq_attn_weights.1} parent=5 // pred_check
        _
      $region10: #{seq_attn_weights.1} parent=5 // pred_check_branch
        %145 = sbr.rel (%p142) target = $region12
      $region11: #{seq_attn_weights.1} parent=5 // pred_region
        %s146 = ssub.s32 %s12, 1
      $region12: #{seq_attn_weights.1} parent=5 // pred_fallthru
        _
      %p147 = scmp.lt.s32.totalorder %s12, 2
      // Predicated region
      $region13: #{seq_attn_weights.1} parent=5 // pred_check
        %p148 = pneg %p147
      $region14: #{seq_attn_weights.1} parent=5 // pred_check_branch
        %150 = sbr.rel (%p148) target = $region16
      $region15: #{seq_attn_weights.1} parent=5 // pred_region
        // Predicated region
        $region17: #{seq_attn_weights.1} parent=15 // pred_check
          %p151 = pneg %p46
        $region18: #{seq_attn_weights.1} parent=15 // pred_check_branch
          %153 = sbr.rel (%p151) target = $region20
        $region19: #{seq_attn_weights.1} parent=15 // pred_region
          %p154 = scmp.lt.s32.totalorder %s19, 1
          %s155 = scalar_select %p154, %s19, 1
          %p156 = scmp.lt.s32.totalorder %s20, 0
          %s157 = scalar_select %p156, %s20, 0
          %s158 = sadd.s32 %s157, %s155
          %s159 = smul.addr %s158, 8
          %s160 = scalar_lea.vmem %s0, %s159
        $region20: #{seq_attn_weights.1} parent=15 // pred_fallthru
          _
        // Predicated region
        $region21: #{seq_attn_weights.1} parent=15 // pred_check
          %p161 = pneg %p72
        $region22: #{seq_attn_weights.1} parent=15 // pred_check_branch
          %163 = sbr.rel (%p161) target = $region24
        $region23: #{seq_attn_weights.1} parent=15 // pred_region
          %p164 = scmp.lt.s32.totalorder %s19, 1
          %s165 = scalar_select %p164, %s19, 1
          %s166 = scalar_lea.vmem %s1, %s165
        $region24: #{seq_attn_weights.1} parent=15 // pred_fallthru
          _
        // Predicated region
        $region25: #{seq_attn_weights.1} parent=15 // pred_check
          %p167 = pneg %p98
        $region26: #{seq_attn_weights.1} parent=15 // pred_check_branch
          %169 = sbr.rel (%p167) target = $region28
        $region27: #{seq_attn_weights.1} parent=15 // pred_region
          %p170 = scmp.lt.s32.totalorder %s19, 1
          %s171 = scalar_select %p170, %s19, 1
          %s172 = scalar_lea.vmem %s2, %s171
        $region28: #{seq_attn_weights.1} parent=15 // pred_fallthru
          _
      $region16: #{seq_attn_weights.1} parent=5 // pred_fallthru
        _
      %p173 = scmp.le.s32.totalorder 1, %s12
      %p174 = scmp.lt.s32.totalorder %s12, 3
      %p175 = pnand %p173, %p174
      %p176 = pneg %p175
      // Predicated region
      $region29: #{seq_attn_weights.1} parent=5 // pred_check
        _
      $region30: #{seq_attn_weights.1} parent=5 // pred_check_branch
        %178 = sbr.rel (%p175) target = $region32
      $region31: #{seq_attn_weights.1} parent=5 // pred_region
        %s179 = ssub.s32 %s12, 1
        %p180 = scmp.lt.s32.totalorder %s21, 1
        %s181 = scalar_select %p180, %s21, 1
        %p182 = scmp.lt.s32.totalorder %s22, 0
        %s183 = scalar_select %p182, %s22, 0
        %s184 = sadd.s32 %s183, %s181
        %s185 = smul.addr %s184, 8
        %s186 = scalar_lea.vmem %s0, %s185
        %p187 = pneg %p52
        %p188 = pneg %p49
        %p189 = scmp.lt.s32.totalorder %s21, 1
        %s190 = scalar_select %p189, %s21, 1
        %s191 = scalar_lea.vmem %s1, %s190
        %p192 = pneg %p78
        %p193 = pneg %p75
        %p194 = scmp.lt.s32.totalorder %s21, 1
        %s195 = scalar_select %p194, %s21, 1
        %s196 = scalar_lea.vmem %s2, %s195
        %p197 = pneg %p104
        %p198 = pneg %p101
        %p199 = pneg %p132
        %p200 = pneg %p129
        %s201 = sand.u32 %s119, 1
        %s202 = scalar_lea.sflag [#allocation3], %s201
        %s203 = sand.u32 %s119, 1
        %s204 = smul.addr %s203, 8
        %s205 = scalar_lea.vmem [#allocation2], %s204
        %p206 = scmp.lt.s32.totalorder %s21, 1
        %s207 = scalar_select %p206, %s21, 1
        %p208 = scmp.lt.s32.totalorder %s22, 0
        %s209 = scalar_select %p208, %s22, 0
        %s210 = sadd.s32 %s209, %s207
        %s211 = smul.addr %s210, 8
        %s212 = scalar_lea.vmem %s0, %s211
        %p213 = scmp.lt.s32.totalorder %s21, 1
        %s214 = scalar_select %p213, %s21, 1
        %s215 = scalar_lea.vmem %s1, %s214
        %p216 = scmp.lt.s32.totalorder %s21, 1
        %s217 = scalar_select %p216, %s21, 1
        %s218 = scalar_lea.vmem %s2, %s217
        %v219 = vld [vmem:[%s212] sm:$0xff]
        %v220 = vld [vmem:[%s215] sm:$0x1]
        %222 = vset.pattern.permute.xlu0 0
        %223 = vperm.xlu0 %222, %v219
        %v224 = vpop.permute.xlu0 %223
        %v227 = vlaneseq
        %v228 = vshrl.u32 %v227, 7
        %v229 = vsub.s32 0, %v228
        %v230 = vrot.slane %v220, %v229
        %v232 = vadd.f32 %v224, %v230
        %v233 = vld [vmem:[%s218] sm:$0x1]
        %v234 = vsub.f32 1.0, %v233
        %v236 = vlaneseq
        %v237 = vshrl.u32 %v236, 7
        %v238 = vsub.s32 0, %v237
        %v239 = vrot.slane %v234, %v238
        %v241 = vmul.f32 %v232, %v239
        %v242 = vmul.f32 %v233, -10000000.0
        %v244 = vlaneseq
        %v245 = vshrl.u32 %v244, 7
        %v246 = vsub.s32 0, %v245
        %v247 = vrot.slane %v242, %v246
        %v249 = vadd.f32 %v241, %v247
        %vm250 = vcmask 130048
        %v251 = vsel %vm250, %v249, -inf
        %252 = vmax.xlane.f32.xlu0 %v251
        %v253 = vpop.xlane.xlu0 %252
        %v254 = vsub.f32 %v249, %v253
        %v255 = vmul.f32 %v254, 1.442695
        %v256 = vpow.pop %v255
        %v257 = vsel %vm250, %v256, 0.0
        %258 = vadd.xlane.f32.xlu0 %v257
        %v259 = vpop.xlane.xlu0 %258
        %v260 = vrcp.pop %v259
        %v261 = vmul.f32 %v256, %v260
        %262 = vst.msk [vmem:[%s205] sm:$0xff] %vm250, %v261
        %s263 = sand.u32 %s119, 1
        %s264 = scalar_lea.sflag [#allocation3], %s263
        %s265 = sand.u32 %s119, 1
        %s266 = smul.addr %s265, 8
        %s267 = scalar_lea.vmem [#allocation2], %s266
        // Predicated region
        $region33: #{seq_attn_weights.1} parent=31 // pred_check
          %p268 = pneg %p129
        $region34: #{seq_attn_weights.1} parent=31 // pred_check_branch
          %270 = sbr.rel (%p268) target = $region36
        $region35: #{seq_attn_weights.1} parent=31 // pred_region
          %s272 = ssub.s32 128, 128
          %273 = vsyncadd %s264, %s272
          %s274 = sadd.s32 %s22, %s21
          %s275 = smul.addr %s274, 128
          %s276 = scalar_lea.hbm %s3, %s275
          %s278 = sshll.u32 %s267, 4
          %s279 = int_to_ptr.vmem [resolvable:$true] %s278
          %281 = dma.vmem_to_hbm [thread:$0]  %s279, 128, %s276, %s264
        $region36: #{seq_attn_weights.1} parent=31 // pred_fallthru
          _
      $region32: #{seq_attn_weights.1} parent=5 // pred_fallthru
        _
      %p282 = scmp.le.s32.totalorder 2, %s12
      // Predicated region
      $region37: #{seq_attn_weights.1} parent=5 // pred_check
        %p283 = pneg %p282
      $region38: #{seq_attn_weights.1} parent=5 // pred_check_branch
        %285 = sbr.rel (%p283) target = $region40
      $region39: #{seq_attn_weights.1} parent=5 // pred_region
        %s286 = ssub.s32 %s12, 2
        // Predicated region
        $region41: #{seq_attn_weights.1} parent=39 // pred_check
          %p287 = pneg %p135
        $region42: #{seq_attn_weights.1} parent=39 // pred_check_branch
          %289 = sbr.rel (%p287) target = $region44
        $region43: #{seq_attn_weights.1} parent=39 // pred_region
          %s290 = sand.u32 %s120, 1
          %s291 = scalar_lea.sflag [#allocation3], %s290
          %s292 = sand.u32 %s120, 1
          %s293 = smul.addr %s292, 8
          %s294 = scalar_lea.vmem [#allocation2], %s293
          %295 = dma.done %s291, 128
        $region44: #{seq_attn_weights.1} parent=39 // pred_fallthru
          _
      $region40: #{seq_attn_weights.1} parent=5 // pred_fallthru
        _
    $region6: #{seq_attn_weights.1} parent=1 // loop_footer
      %s16 = sadd.s32 1, %s12
    $region7: #{seq_attn_weights.1} parent=1 // loop_footer_branch
      %11 = sbr.rel target = $region3
    $region8: #{seq_attn_weights.1} parent=1 // loop_exit
      _
    %296 = vsyncpa [#allocation3], 1
    %s297 = scalar_lea.sflag [#allocation3], 1
    %298 = vsyncpa %s297, 1

</llo_original>
